<compile_context>
chip_gen: v6e
topology: v6e:2x2x1
jax: 0.10.0
libtpu: 0.0.40
codegen_flags: <defaults>
</compile_context>

<pallas_src>
from collections import OrderedDict
from functools import partial
from typing import List

import numpy as np
import jax
import jax.numpy as jnp
from jax.experimental import pallas as pl
from jax.experimental.pallas import tpu as pltpu

BINARY_CONSTANTS = ['attack', 'back', 'forward', 'jump', 'left', 'right', 'sneak', 'sprint']

# Column bookkeeping of the original module:
#   BCE:  pred[:, [2, 4, 6, 7]]  vs  categorical targets (4 cols)
#   MSE:  pred[:, [0, 1, 3, 5]]  vs  regression targets  (4 cols)
_BCE_COLS = (2, 4, 6, 7)
_MSE_COLS = (0, 1, 3, 5)


# ---------------------------------------------------------------------------
# Host-side glue: faithful port of action_dict_to_tensor_v2 (returns np array)
# ---------------------------------------------------------------------------
def action_dict_to_tensor_v2(x: OrderedDict, keys: List[str], contains: bool) -> np.ndarray:
    tensor = (
        [x['camera'][0][0] / 180.0, x['camera'][0][1] / 180.0]
        if (contains and 'camera' in keys) or (not contains and 'camera' not in keys)
        else []
    )
    idx = 0
    while idx < len(BINARY_CONSTANTS):
        action_name = BINARY_CONSTANTS[idx]
        if (contains and action_name in keys) or (not contains and action_name not in keys):
            if action_name in ['back', 'forward', 'left', 'right']:
                action_name_2 = BINARY_CONSTANTS[idx + 1]
                if x[action_name][0] == 1:
                    tensor.append(-1)
                elif x[action_name_2][0] == 1:
                    tensor.append(1)
                else:
                    tensor.append(0)
                idx += 1
            else:
                tensor.append(x[action_name][0])
        idx += 1
    return np.asarray(tensor, dtype=np.float32)


def build_imitation_targets_v2(y: List[OrderedDict]) -> np.ndarray:
    """Host-side: build one (B, 8) float32 target with target col r aligned to pred col r."""
    keys = ['camera', 'back', 'forward', 'left', 'right']
    cat = np.stack([action_dict_to_tensor_v2(s, keys, contains=False) for s in y])  # (B,4)
    mse = np.stack([action_dict_to_tensor_v2(s, keys, contains=True) for s in y])   # (B,4)
    tgt = np.empty((len(y), 8), dtype=np.float32)
    tgt[:, list(_BCE_COLS)] = cat
    tgt[:, list(_MSE_COLS)] = mse
    return tgt


# ---------------------------------------------------------------------------
# Pallas kernel: lane-dense   sum(BCE) + sum(MSE)   with per-lane accumulation
# ---------------------------------------------------------------------------
def _imitation_loss_kernel(pred_ref, tgt_ref, out_ref, acc_ref, *,
                           n_rows, row_tile, tiles_per_core, inv_norm, mask_needed):
    i = pl.program_id(1)                      # reduction ("arbitrary") axis

    @pl.when(i == 0)
    def _init():
        acc_ref[...] = jnp.zeros_like(acc_ref)

    # Cast in-kernel so lower-precision producers can stay narrow in HBM.
    p = pred_ref[...].astype(jnp.float32)     # (row_tile, 128)
    t = tgt_ref[...].astype(jnp.float32)      # (row_tile, 128)

    # pred column index of each lane under the free (B,8)->(R,128) reshape.
    col = jax.lax.broadcasted_iota(jnp.int32, (1, 128), 1) % 8
    is_bce = (col == 2) | (col == 4) | (col == 6) | (col == 7)

    # torch.nn.BCELoss clamps each log term at -100, reproduced here.
    # TODO(synk): if the producer can hand over logits, switch to
    # BCE-with-logits (one softplus per element) to halve EUP work (v7x/v5e).
    log_p = jnp.maximum(jnp.log(p), -100.0)
    log_1mp = jnp.maximum(jnp.log(1.0 - p), -100.0)
    bce = -(t * log_p + (1.0 - t) * log_1mp)
    diff = p - t
    mse = diff * diff
    # SELECT (not multiply-by-mask): log() on MSE lanes may be NaN/-inf and is
    # discarded here; host-padded tail elements (p = t = 1) contribute exactly 0.
    elem = jnp.where(is_bce, bce, mse)        # (row_tile, 128)

    if mask_needed:
        g = pl.program_id(0) * tiles_per_core + i       # global tile index
        is_boundary = (g + 1) * row_tile > n_rows        # partial or ghost tile

        @pl.when(jnp.logical_not(is_boundary))
        def _interior():
            acc_ref[...] += jnp.sum(elem, axis=0, keepdims=True)

        @pl.when(is_boundary)
        def _tail():
            row = (jax.lax.broadcasted_iota(jnp.int32, (row_tile, 1), 0)
                   + g * row_tile)
            acc_ref[...] += jnp.sum(jnp.where(row < n_rows, elem, 0.0),
                                    axis=0, keepdims=True)
    else:
        acc_ref[...] += jnp.sum(elem, axis=0, keepdims=True)

    @pl.when(i == tiles_per_core - 1)
    def _finalize():
        # Per-lane partials, already scaled by 1/(4B); the wrapper does the
        # tiny final cross-lane / cross-core sum.
        out_ref[...] = (acc_ref[...] * inv_norm).reshape(1, 1, 128)


def imitation_loss_v2(pred: jnp.ndarray, targets: jnp.ndarray, *,
                      row_tile: int = 8192) -> jnp.ndarray:
    """pred: (B, 8); targets: (B, 8) interleaved (build_imitation_targets_v2). Scalar loss."""
    pred = jnp.asarray(pred)
    targets = jnp.asarray(targets)
    B = pred.shape[0]
    assert pred.shape == (B, 8), pred.shape
    assert targets.shape == (B, 8), targets.shape

    # Pad batch to a multiple of 16 so (B,8) reshapes for free to (R,128).
    # Padding with p = t = 1 contributes exactly 0 to both BCE and MSE terms.
    if B % 16 != 0:
        pad = 16 - B % 16
        pred = jnp.pad(pred, ((0, pad), (0, 0)), constant_values=1.0)
        targets = jnp.pad(targets, ((0, pad), (0, 0)), constant_values=1.0)
    R = pred.shape[0] // 16                   # rows of 128 lanes (16 samples each)

    # Layout plumbing only: contiguous row-major reshape (no transpose, no copy).
    pred_l = pred.reshape(R, 128)
    tgt_l = targets.reshape(R, 128)

    # Tiling: default 8192 rows -> 4 MiB per input block, 16 MiB double-buffered.
    row_tile = min(int(row_tile), R)
    if row_tile < R:
        row_tile = max(8, (row_tile // 8) * 8)          # (8,128) block constraint
    n_tiles = pl.cdiv(R, row_tile)

    # Two-way "parallel" leading axis: v7x's second TensorCore streams half the
    # batch; on 1-TC chips it is just one extra cheap init/finalize pass.
    n_cores = 2 if n_tiles > 1 else 1
    tiles_per_core = pl.cdiv(n_tiles, n_cores)
    n_tiles_padded = n_cores * tiles_per_core
    mask_needed = (R % row_tile != 0) or (n_tiles_padded != n_tiles)

    if n_tiles_padded == n_tiles:
        def in_map(c, i):
            return (c * tiles_per_core + i, 0)
    else:
        def in_map(c, i):
            # Ghost tiles (only on the last core) re-read a valid block; the
            # in-kernel row mask zeroes their contribution.
            return (jnp.minimum(c * tiles_per_core + i, n_tiles - 1), 0)

    kernel = partial(
        _imitation_loss_kernel,
        n_rows=R, row_tile=row_tile, tiles_per_core=tiles_per_core,
        inv_norm=1.0 / (4.0 * B), mask_needed=mask_needed)

    bytes_in = 8 * B * (jnp.dtype(pred.dtype).itemsize
                        + jnp.dtype(targets.dtype).itemsize)
    cost = pl.CostEstimate(flops=96 * B, transcendentals=16 * B,
                           bytes_accessed=bytes_in + n_cores * 128 * 4)

    out = pl.pallas_call(
        kernel,
        out_shape=jax.ShapeDtypeStruct((n_cores, 1, 128), jnp.float32),
        grid=(n_cores, tiles_per_core),
        in_specs=[pl.BlockSpec((row_tile, 128), in_map),
                  pl.BlockSpec((row_tile, 128), in_map)],
        out_specs=pl.BlockSpec((1, 1, 128), lambda c, i: (c, 0, 0)),
        scratch_shapes=[pltpu.VMEM((1, 128), jnp.float32)],
        compiler_params=pltpu.CompilerParams(
            dimension_semantics=("parallel", "arbitrary"),
            vmem_limit_bytes=32 * 1024 * 1024),
        cost_estimate=cost,
    )(pred_l, tgt_l)
    # TODO(synk): self.writer.add_scalars(...) TensorBoard logging (and the
    # `idx` global-step argument) have no Pallas equivalent; only the loss is
    # computed here.
    return jnp.sum(out)


# ---------------------------------------------------------------------------
# Example / smoke test
# ---------------------------------------------------------------------------
def _make_action_dict(rng: np.random.RandomState) -> OrderedDict:
    d = OrderedDict()
    d['camera'] = [[float(rng.uniform(-180, 180)), float(rng.uniform(-180, 180))]]
    for name in BINARY_CONSTANTS:
        d[name] = [int(rng.randint(0, 2))]
    return d


def _reference_loss(pred: np.ndarray, targets: np.ndarray) -> float:
    p = np.asarray(pred, np.float64)
    t = np.asarray(targets, np.float64)
    bc, mc = list(_BCE_COLS), list(_MSE_COLS)
    log_p = np.maximum(np.log(p[:, bc]), -100.0)
    log_1mp = np.maximum(np.log(1.0 - p[:, bc]), -100.0)
    bce = np.mean(-(t[:, bc] * log_p + (1.0 - t[:, bc]) * log_1mp))
    mse = np.mean((p[:, mc] - t[:, mc]) ** 2)
    return float(bce + mse)


if __name__ == "__main__":
    rng = np.random.RandomState(0)
    key = jax.random.PRNGKey(0)

    checks = [
        dict(B=32, row_tile=8192),   # aligned fast path: free reshape, single tile
        dict(B=20, row_tile=8192),   # batch-padding path (B % 16 != 0)
        dict(B=384, row_tile=8),     # multi-tile + 2-way parallel axis + ghost-tile mask
    ]
    for k_i, cfg in enumerate(checks):
        B = cfg['B']
        kb = jax.random.fold_in(key, k_i)
        # Predictions in (0, 1) so BCE is well-defined (module contract).
        pred = jax.nn.sigmoid(jax.random.normal(kb, (B, 8), dtype=jnp.float32))
        # Deterministic synthetic action dicts -> interleaved target (host glue).
        y = [_make_action_dict(rng) for _ in range(B)]
        targets = build_imitation_targets_v2(y)

        loss = imitation_loss_v2(pred, jnp.asarray(targets), row_tile=cfg['row_tile'])
        loss = jax.block_until_ready(loss)

        ref = _reference_loss(np.asarray(pred), targets)
        assert abs(float(loss) - ref) < 1e-4, (cfg, float(loss), ref)

    print("KERNEL_OK")
</pallas_src>

<mosaic_0001>
module attributes {stable_mosaic.version = 11 : i64} {
  func.func @_imitation_loss_kernel(%arg0: i32, %arg1: i32, %arg2: memref<2x128xf32, #tpu.memory_space<vmem>>, %arg3: memref<2x128xf32, #tpu.memory_space<vmem>>, %arg4: memref<1x1x128xf32, #tpu.memory_space<vmem>>, %arg5: memref<1x128xf32, #tpu.memory_space<vmem>>) attributes {dimension_semantics = [#tpu.dimension_semantics<parallel>, #tpu.dimension_semantics<arbitrary>], iteration_bounds = array<i64: 1, 1>, scalar_prefetch = 0 : i64, scratch_operands = 1 : i64, tpu.core_type = #tpu.core_type<tc>, window_params = [{transform_indices = @transform_0, window_bounds = array<i64: 2, 128>}, {transform_indices = @transform_1, window_bounds = array<i64: 2, 128>}, {transform_indices = @transform_2, window_bounds = array<i64: 1, 1, 128>}]} {
    %c0_i32 = arith.constant 0 : i32
    %0 = arith.cmpi eq, %arg1, %c0_i32 : i32
    %1 = arith.extui %0 : i1 to i32
    %c0_i32_0 = arith.constant 0 : i32
    %2 = arith.cmpi ne, %1, %c0_i32_0 : i32
    scf.if %2 {
      %cst_19 = arith.constant 0.000000e+00 : f32
      %61 = vector.broadcast %cst_19 : f32 to vector<1x128xf32>
      %c0_20 = arith.constant 0 : index
      %c0_21 = arith.constant 0 : index
      %62 = vector.load %arg5[%c0_20, %c0_21] : memref<1x128xf32, #tpu.memory_space<vmem>>, vector<1x128xf32>
      tpu.vector_store %arg5[%c0_20, %c0_21], %61 {strides = array<i32>} : memref<1x128xf32, #tpu.memory_space<vmem>>, vector<1x128xf32>,
    } else {
    }
    %c0 = arith.constant 0 : index
    %c0_1 = arith.constant 0 : index
    %3 = vector.load %arg2[%c0, %c0_1] : memref<2x128xf32, #tpu.memory_space<vmem>>, vector<2x128xf32>
    %c0_2 = arith.constant 0 : index
    %c0_3 = arith.constant 0 : index
    %4 = vector.load %arg3[%c0_2, %c0_3] : memref<2x128xf32, #tpu.memory_space<vmem>>, vector<2x128xf32>
    %5 = tpu.iota {dimensions = array<i32: 1>} : vector<1x128xi32>
    %c8_i32 = arith.constant 8 : i32
    %c0_i32_4 = arith.constant 0 : i32
    %6 = arith.cmpi eq, %c8_i32, %c0_i32_4 : i32
    %c1_i32 = arith.constant 1 : i32
    %7 = arith.select %6, %c1_i32, %c8_i32 : i32
    %8 = vector.broadcast %7 : i32 to vector<1x128xi32>
    %9 = arith.remsi %5, %8 : vector<1x128xi32>
    %c0_i32_5 = arith.constant 0 : i32
    %10 = vector.broadcast %c0_i32_5 : i32 to vector<1x128xi32>
    %11 = arith.cmpi ne, %9, %10 : vector<1x128xi32>
    %c0_i32_6 = arith.constant 0 : i32
    %12 = vector.broadcast %c0_i32_6 : i32 to vector<1x128xi32>
    %13 = arith.cmpi slt, %9, %12 : vector<1x128xi32>
    %c0_i32_7 = arith.constant 0 : i32
    %14 = arith.cmpi slt, %7, %c0_i32_7 : i32
    %15 = vector.broadcast %14 : i1 to vector<1x128xi1>
    %16 = vector.broadcast %15 : vector<1x128xi1> to vector<1x128xi1>
    %17 = arith.xori %13, %16 : vector<1x128xi1>
    %18 = arith.andi %17, %11 : vector<1x128xi1>
    %19 = vector.broadcast %7 : i32 to vector<1x128xi32>
    %20 = arith.addi %9, %19 : vector<1x128xi32>
    %21 = arith.select %18, %20, %9 : vector<1x128xi1>, vector<1x128xi32>
    %c2_i32 = arith.constant 2 : i32
    %22 = vector.broadcast %c2_i32 : i32 to vector<1x128xi32>
    %23 = arith.cmpi eq, %21, %22 : vector<1x128xi32>
    %c4_i32 = arith.constant 4 : i32
    %24 = vector.broadcast %c4_i32 : i32 to vector<1x128xi32>
    %25 = arith.cmpi eq, %21, %24 : vector<1x128xi32>
    %26 = arith.ori %23, %25 : vector<1x128xi1>
    %c6_i32 = arith.constant 6 : i32
    %27 = vector.broadcast %c6_i32 : i32 to vector<1x128xi32>
    %28 = arith.cmpi eq, %21, %27 : vector<1x128xi32>
    %29 = arith.ori %26, %28 : vector<1x128xi1>
    %c7_i32 = arith.constant 7 : i32
    %30 = vector.broadcast %c7_i32 : i32 to vector<1x128xi32>
    %31 = arith.cmpi eq, %21, %30 : vector<1x128xi32>
    %32 = arith.ori %29, %31 : vector<1x128xi1>
    %33 = math.log %3 : vector<2x128xf32>
    %cst = arith.constant -1.000000e+02 : f32
    %34 = vector.broadcast %cst : f32 to vector<2x128xf32>
    %35 = arith.maximumf %33, %34 : vector<2x128xf32>
    %cst_8 = arith.constant 1.000000e+00 : f32
    %36 = vector.broadcast %cst_8 : f32 to vector<2x128xf32>
    %37 = arith.subf %36, %3 : vector<2x128xf32>
    %38 = math.log %37 : vector<2x128xf32>
    %cst_9 = arith.constant -1.000000e+02 : f32
    %39 = vector.broadcast %cst_9 : f32 to vector<2x128xf32>
    %40 = arith.maximumf %38, %39 : vector<2x128xf32>
    %41 = arith.mulf %4, %35 : vector<2x128xf32>
    %cst_10 = arith.constant 1.000000e+00 : f32
    %42 = vector.broadcast %cst_10 : f32 to vector<2x128xf32>
    %43 = arith.subf %42, %4 : vector<2x128xf32>
    %44 = arith.mulf %43, %40 : vector<2x128xf32>
    %45 = arith.addf %41, %44 : vector<2x128xf32>
    %cst_11 = arith.constant 0.000000e+00 : f32
    %46 = vector.broadcast %cst_11 : f32 to vector<2x128xf32>
    %47 = arith.subf %46, %45 : vector<2x128xf32>
    %48 = arith.subf %3, %4 : vector<2x128xf32>
    %49 = arith.mulf %48, %48 : vector<2x128xf32>
    %50 = vector.shape_cast %32 : vector<1x128xi1> to vector<1x128xi1>
    %51 = vector.broadcast %50 : vector<1x128xi1> to vector<2x128xi1>
    %52 = arith.select %51, %47, %49 : vector<2x128xi1>, vector<2x128xf32>
    %c0_12 = arith.constant 0 : index
    %c0_13 = arith.constant 0 : index
    %53 = vector.load %arg5[%c0_12, %c0_13] : memref<1x128xf32, #tpu.memory_space<vmem>>, vector<1x128xf32>
    %cst_14 = arith.constant dense<0.000000e+00> : vector<128xf32>
    %54 = vector.multi_reduction <add>, %52, %cst_14 [0] : vector<2x128xf32> to vector<128xf32>
    %55 = vector.shape_cast %54 : vector<128xf32> to vector<1x128xf32>
    %56 = arith.addf %53, %55 : vector<1x128xf32>
    %c0_15 = arith.constant 0 : index
    %c0_16 = arith.constant 0 : index
    %57 = vector.load %arg5[%c0_15, %c0_16] : memref<1x128xf32, #tpu.memory_space<vmem>>, vector<1x128xf32>
    tpu.vector_store %arg5[%c0_15, %c0_16], %56 {strides = array<i32>} : memref<1x128xf32, #tpu.memory_space<vmem>>, vector<1x128xf32>,
    %c0_i32_17 = arith.constant 0 : i32
    %58 = arith.cmpi eq, %arg1, %c0_i32_17 : i32
    %59 = arith.extui %58 : i1 to i32
    %c0_i32_18 = arith.constant 0 : i32
    %60 = arith.cmpi ne, %59, %c0_i32_18 : i32
    scf.if %60 {
      %c0_19 = arith.constant 0 : index
      %c0_20 = arith.constant 0 : index
      %61 = vector.load %arg5[%c0_19, %c0_20] : memref<1x128xf32, #tpu.memory_space<vmem>>, vector<1x128xf32>
      %cst_21 = arith.constant 7.812500e-03 : f32
      %62 = vector.broadcast %cst_21 : f32 to vector<1x128xf32>
      %63 = arith.mulf %61, %62 : vector<1x128xf32>
      %64 = vector.shape_cast %63 : vector<1x128xf32> to vector<1x1x128xf32>
      %c0_22 = arith.constant 0 : index
      %c0_23 = arith.constant 0 : index
      %c0_24 = arith.constant 0 : index
      %65 = vector.load %arg4[%c0_22, %c0_23, %c0_24] : memref<1x1x128xf32, #tpu.memory_space<vmem>>, vector<1x1x128xf32>
      tpu.vector_store %arg4[%c0_22, %c0_23, %c0_24], %64 {strides = array<i32>} : memref<1x1x128xf32, #tpu.memory_space<vmem>>, vector<1x1x128xf32>,
    } else {
    }
    return
  }
  func.func @transform_0(%arg0: i32, %arg1: i32) -> (i32, i32) {
    %c1_i32 = arith.constant 1 : i32
    %0 = arith.muli %arg0, %c1_i32 : i32
    %1 = arith.addi %0, %arg1 : i32
    %c0_i32 = arith.constant 0 : i32
    %c0_i32_0 = arith.constant 0 : i32
    return %1, %c0_i32 : i32, i32
  }
  func.func @transform_1(%arg0: i32, %arg1: i32) -> (i32, i32) {
    %c1_i32 = arith.constant 1 : i32
    %0 = arith.muli %arg0, %c1_i32 : i32
    %1 = arith.addi %0, %arg1 : i32
    %c0_i32 = arith.constant 0 : i32
    %c0_i32_0 = arith.constant 0 : i32
    return %1, %c0_i32 : i32, i32
  }
  func.func @transform_2(%arg0: i32, %arg1: i32) -> (i32, i32, i32) {
    %c0_i32 = arith.constant 0 : i32
    %c0_i32_0 = arith.constant 0 : i32
    %c0_i32_1 = arith.constant 0 : i32
    return %arg0, %c0_i32, %c0_i32_0 : i32, i32, i32
  }
}

</mosaic_0001>

<llo_original>
// kernel: tpu_custom_call.1
$region0: #{tpu_custom_call.1}
  #allocation0 [shape = 'u32[]', space=smem, size = 0x4, offset = 0x4, fixed_abs, tag = 'smem constant byte address 0x4 - core index']
  #allocation1 [shape = 'u32[144,128]{1,0:T(1,128)}', space=vmem, size = 0x12000, scoped, tag = 'internal scratch']
  #allocation2 [shape = 'f32[1,128]{1,0:T(1,128)}', space=vmem, size = 0x200, scoped, tag = 'scratch operand']
  %s0 = inlined_call_operand.hbm [shape: f32[2,128], index: 0, kind: input, shape index: {}]
  %s1 = inlined_call_operand.hbm [shape: f32[2,128], index: 1, kind: input, shape index: {}]
  %s2 = inlined_call_operand.hbm [shape: f32[1,1,128], index: 2, kind: output, shape index: {}]
  %s3 = sld [smem:[#allocation0]]
  $region34: #{tpu_custom_call.1} parent=0
    _
  %s5 = ssub.s32 1, %s3
  %s6 = scalar_select 0, %s5, %s3
  $region1: #{tpu_custom_call.1} parent=0
    #allocation3 [shape = 'u8[1024]{0}', space=vmem, size = 0x400, scoped, tag = 'input window, operand 0, single buffered']
    #allocation4 [shape = 's32[1]{0}', space=sflag, size = 0x4, scoped, tag = 'scoped memory for tpu_custom_call.1']
    #allocation5 [shape = 's32[1]{0}', space=sflag, size = 0x4, scoped, tag = 'scoped memory for tpu_custom_call.1']
    #allocation6 [shape = 'u8[1024]{0}', space=vmem, size = 0x400, scoped, tag = 'input window, operand 1, single buffered']
    #allocation7 [shape = 's32[1]{0}', space=sflag, size = 0x4, scoped, tag = 'scoped memory for tpu_custom_call.1']
    #allocation8 [shape = 'u8[512]{0}', space=vmem, size = 0x400, scoped, tag = 'output window, operand 0, single buffered']
    %7 = vsyncpa [#allocation4], 0
    %8 = vsyncpa [#allocation7], 0
    %9 = vsyncpa [#allocation5], 0
    // Predicated region
    $region2: #{tpu_custom_call.1} parent=1 // pred_check
      _
    $region3: #{tpu_custom_call.1} parent=1 // pred_check_branch
      %11 = sbr.rel (0) target = $region5
    $region4: #{tpu_custom_call.1} parent=1 // pred_region
      %s12 = sadd.s32 0, 0
      %s14 = ssub.s32 32, 32
      %15 = vsyncadd [#allocation4], %s14
      %s16 = smul.addr %s12, 32
      %s17 = scalar_lea.hbm %s0, %s16
      %s19 = sshll.u32 [#allocation3], 4
      %s20 = int_to_ptr.vmem [resolvable:$true] %s19
      %22 = dma.hbm_to_vmem [thread:$0]  %s17, 32, %s20, [#allocation4]
    $region5: #{tpu_custom_call.1} parent=1 // pred_fallthru
      _
    // Predicated region
    $region6: #{tpu_custom_call.1} parent=1 // pred_check
      _
    $region7: #{tpu_custom_call.1} parent=1 // pred_check_branch
      %24 = sbr.rel (0) target = $region9
    $region8: #{tpu_custom_call.1} parent=1 // pred_region
      %s25 = sadd.s32 0, 0
      %s27 = ssub.s32 32, 32
      %28 = vsyncadd [#allocation7], %s27
      %s29 = smul.addr %s25, 32
      %s30 = scalar_lea.hbm %s1, %s29
      %s32 = sshll.u32 [#allocation6], 4
      %s33 = int_to_ptr.vmem [resolvable:$true] %s32
      %35 = dma.hbm_to_vmem [thread:$0]  %s30, 32, %s33, [#allocation7]
    $region9: #{tpu_custom_call.1} parent=1 // pred_fallthru
      _
    // Predicated region
    $region10: #{tpu_custom_call.1} parent=1 // pred_check
      _
    $region11: #{tpu_custom_call.1} parent=1 // pred_check_branch
      %37 = sbr.rel (0) target = $region13
    $region12: #{tpu_custom_call.1} parent=1 // pred_region
      %38 = dma.done [#allocation4], 32
    $region13: #{tpu_custom_call.1} parent=1 // pred_fallthru
      _
    // Predicated region
    $region14: #{tpu_custom_call.1} parent=1 // pred_check
      _
    $region15: #{tpu_custom_call.1} parent=1 // pred_check_branch
      %40 = sbr.rel (0) target = $region17
    $region16: #{tpu_custom_call.1} parent=1 // pred_region
      %41 = dma.done [#allocation7], 32
    $region17: #{tpu_custom_call.1} parent=1 // pred_fallthru
      _
    %s42 = sadd.s32 0, 0
    %s43 = sadd.s32 0, 0
    %p44 = scmp.eq.s32.totalorder 0, 0
    // Predicated region
    $region18: #{tpu_custom_call.1} parent=1 // pred_check
      %p45 = pneg %p44
    $region19: #{tpu_custom_call.1} parent=1 // pred_check_branch
      %47 = sbr.rel (%p45) target = $region21
    $region20: #{tpu_custom_call.1} parent=1 // pred_region
      %48 = vst [vmem:[#allocation2] sm:$0x1] 0.0
    $region21: #{tpu_custom_call.1} parent=1 // pred_fallthru
      _
    %v49 = vld [vmem:[#allocation3] sm:$0x3]
    %v50 = vld [vmem:[#allocation6] sm:$0x3]
    %v51 = vlaneseq
    %v52 = vand.u32 %v51, 127
    %vm53 = vcmp.lt.s32.totalorder %v52, 0
    %v54 = vsub.s32 0, %v52
    %v55 = vsel %vm53, %v54, %v52
    %v56 = vshrl.u32 %v55, 3
    %v57 = vand.u32 %v55, 7
    %v58 = vsub.s32 0, %v57
    %v59 = vsel %vm53, %v58, %v57
    %vm60 = vcmp.ne.s32.totalorder %v59, 0
    %vm61 = vcmp.lt.s32.totalorder %v59, 0
    %vm62 = vmand %vm61, %vm60
    %v63 = vadd.s32 %v59, 8
    %v64 = vsel %vm62, %v63, %v59
    %vm65 = vcmp.eq.s32.totalorder %v64, 2
    %vm66 = vcmp.eq.s32.totalorder %v64, 4
    %vm67 = vmor %vm65, %vm66
    %vm68 = vcmp.eq.s32.totalorder %v64, 6
    %vm69 = vmor %vm67, %vm68
    %vm70 = vcmp.eq.s32.totalorder %v64, 7
    %vm71 = vmor %vm69, %vm70
    %v72 = vlog2.pop %v49
    %v73 = vmul.f32 %v72, 0.6931472
    %v74 = vmax.f32 %v73, -100.0
    %v75 = vsub.f32 1.0, %v49
    %v76 = vlog2.pop %v75
    %v77 = vmul.f32 %v76, 0.6931472
    %v78 = vmax.f32 %v77, -100.0
    %v79 = vmul.f32 %v50, %v74
    %v80 = vsub.f32 1.0, %v50
    %v81 = vmul.f32 %v80, %v78
    %v82 = vadd.f32 %v79, %v81
    %v83 = vsub.f32 0.0, %v82
    %v84 = vsub.f32 %v49, %v50
    %v85 = vmul.f32 %v84, %v84
    %v86 = vsel %vm71, 1, 0
    %vm87 = vcmp.eq.s32.totalorder %v86, 1
    %v88 = vsel %vm87, %v83, %v85
    %v89 = vld [vmem:[#allocation2] sm:$0x1]
    %vm90 = vcmask 1041408
    %v91 = vsel %vm90, %v88, 0.0
    %v92 = vrot.slane %v91, 4
    %v93 = vadd.f32 %v91, %v92
    %v94 = vrot.slane %v93, 2
    %v95 = vadd.f32 %v93, %v94
    %v96 = vrot.slane %v95, 1
    %v97 = vadd.f32 %v95, %v96
    %v98 = vadd.f32 %v89, %v97
    %99 = vst [vmem:[#allocation2] sm:$0x1] %v98
    // Predicated region
    $region22: #{tpu_custom_call.1} parent=1 // pred_check
      %p100 = pneg %p44
    $region23: #{tpu_custom_call.1} parent=1 // pred_check_branch
      %102 = sbr.rel (%p100) target = $region25
    $region24: #{tpu_custom_call.1} parent=1 // pred_region
      %v103 = vld [vmem:[#allocation2] sm:$0x1]
      %v104 = vmul.f32 %v103, 0.0078125
      %105 = vst [vmem:[#allocation8] sm:$0x1] %v104
    $region25: #{tpu_custom_call.1} parent=1 // pred_fallthru
      _
    // Predicated region
    $region26: #{tpu_custom_call.1} parent=1 // pred_check
      _
    $region27: #{tpu_custom_call.1} parent=1 // pred_check_branch
      %107 = sbr.rel (0) target = $region29
    $region28: #{tpu_custom_call.1} parent=1 // pred_region
      %s109 = ssub.s32 16, 16
      %110 = vsyncadd [#allocation5], %s109
      %s112 = sshll.u32 [#allocation8], 4
      %s113 = int_to_ptr.vmem [resolvable:$true] %s112
      %115 = dma.vmem_to_hbm [thread:$0]  %s113, 16, %s2, [#allocation5]
    $region29: #{tpu_custom_call.1} parent=1 // pred_fallthru
      _
    // Predicated region
    $region30: #{tpu_custom_call.1} parent=1 // pred_check
      _
    $region31: #{tpu_custom_call.1} parent=1 // pred_check_branch
      %117 = sbr.rel (0) target = $region33
    $region32: #{tpu_custom_call.1} parent=1 // pred_region
      %118 = dma.done [#allocation5], 16
    $region33: #{tpu_custom_call.1} parent=1 // pred_fallthru
      _
    %119 = vsyncpa [#allocation4], 1
    %120 = vsyncpa [#allocation7], 1
    %121 = vsyncpa [#allocation5], 1

</llo_original>
